<compile_context>
chip_gen: v6e
topology: v6e:2x2x1
jax: 0.10.0
libtpu: 0.0.40
codegen_flags: <defaults>
</compile_context>

<pallas_src>
import jax
import jax.numpy as jnp
from jax.experimental import pallas as pl
from jax.experimental.pallas import tpu as pltpu


def _round_up(n, m):
    return ((n + m - 1) // m) * m


def _vmem_limit_bytes():
    """Generation-aware VMEM limit: 7/8 of physical capacity (v7x 64MiB -> 56MiB,
    v5e/v6e 128MiB -> 112MiB); conservative 64MiB fallback if the query fails."""
    try:
        cap = int(pltpu.get_tpu_info().vmem_capacity_bytes)
    except Exception:
        cap = 64 * 1024 * 1024
    return max(32 * 1024 * 1024, (cap * 7) // 8)


def _gate_cross_kernel(x_in_ref, wcat_ref, b_ref, o_ref, x0_ref, x_ref):
    """Grid = (batch_tiles, layers). One layer per innermost grid step.

    x_in_ref : (tm, D)      f32   input tile (resident across the layer axis)
    wcat_ref : (1, D, 2D)   bf16  [W_l^T | Wg_l^T] for the current layer
    b_ref    : (1, 1, D)    f32   bias for the current layer
    o_ref    : (tm, D)            output tile (written once, at the last layer)
    x0_ref   : (tm, D)      f32   scratch: x0
    x_ref    : (tm, D)      f32   scratch: carried x
    """
    l = pl.program_id(1)

    @pl.when(l == 0)
    def _init():
        x0 = x_in_ref[...].astype(jnp.float32)
        x0_ref[...] = x0
        x_ref[...] = x0

    x0 = x0_ref[...]
    x = x_ref[...]
    d = x.shape[-1]

    # Fused matmul: x @ [W^T | Wg^T] -> (tm, 2D), bf16 inputs, f32 accumulation.
    z = jnp.dot(x.astype(jnp.bfloat16), wcat_ref[0],
                preferred_element_type=jnp.float32)
    xw = z[:, :d]                                   # lane-aligned views (D % 128 == 0)
    # sigmoid via EUP: exp + approximate reciprocal (frees VPU slots).
    xg = pl.reciprocal(1.0 + jnp.exp(-z[:, d:]), approx=True)

    x_new = x0 * (xw + b_ref[0]) * xg + x           # all f32 elementwise
    x_ref[...] = x_new

    @pl.when(l == pl.num_programs(1) - 1)
    def _store():
        o_ref[...] = x_new.astype(o_ref.dtype)


def prepare_gate_cross_params(w, wg, b):
    """One-time parameter prep (hoisted out of the per-call path).

    w, wg: (L, D, D) in PyTorch nn.Linear layout (out, in); b: (L, D).
    Pads D up to a multiple of 128, transposes, concatenates and casts:
    returns (wcat, b2) with wcat (L, Dp, 2*Dp) bf16 = [W^T | Wg^T], b2 (L, 1, Dp) f32.
    Zero padding is exactly preserved through the layer recursion (padded feature
    columns of x0/x stay 0), so slicing the output back to D is exact.
    """
    L, D, _ = w.shape
    Dp = _round_up(D, 128)
    pad = Dp - D
    if pad:
        w = jnp.pad(w, ((0, 0), (0, pad), (0, pad)))
        wg = jnp.pad(wg, ((0, 0), (0, pad), (0, pad)))
        b = jnp.pad(b, ((0, 0), (0, pad)))
    wT = jnp.transpose(w, (0, 2, 1))
    wgT = jnp.transpose(wg, (0, 2, 1))
    wcat = jnp.concatenate([wT, wgT], axis=-1).astype(jnp.bfloat16)   # (L, Dp, 2*Dp)
    b2 = b.reshape(L, 1, Dp).astype(jnp.float32)
    return wcat, b2


def gate_cross_layer(x, wcat, b2, *, tile_m=512):
    """x: (B, D) f32; wcat: (L, Dp, 2*Dp) bf16; b2: (L, 1, Dp) f32 (from prepare_gate_cross_params)."""
    B, D = x.shape
    L, Dp, Dp2 = wcat.shape
    assert Dp2 == 2 * Dp and Dp % 128 == 0 and Dp >= D
    assert b2.shape == (L, 1, Dp)

    # Clamp the batch tile for tiny batches, then zero-pad batch and feature dims.
    tile_m = max(8, min(tile_m, _round_up(B, 8)))
    Bp = _round_up(B, tile_m)
    pad_b, pad_d = Bp - B, Dp - D
    xp = jnp.pad(x, ((0, pad_b), (0, pad_d))) if (pad_b or pad_d) else x

    out = pl.pallas_call(
        _gate_cross_kernel,
        out_shape=jax.ShapeDtypeStruct((Bp, Dp), x.dtype),
        grid_spec=pltpu.PrefetchScalarGridSpec(
            num_scalar_prefetch=0,
            grid=(Bp // tile_m, L),                                    # layers innermost
            in_specs=[
                pl.BlockSpec((tile_m, Dp), lambda i, l: (i, 0)),       # x tile (resident over l)
                pl.BlockSpec((1, Dp, 2 * Dp), lambda i, l: (l, 0, 0)), # per-layer [W^T|Wg^T]
                pl.BlockSpec((1, 1, Dp), lambda i, l: (l, 0, 0)),      # per-layer bias
            ],
            out_specs=pl.BlockSpec((tile_m, Dp), lambda i, l: (i, 0)), # written at l == L-1
            scratch_shapes=[
                pltpu.VMEM((tile_m, Dp), jnp.float32),                 # x0
                pltpu.VMEM((tile_m, Dp), jnp.float32),                 # carried x
            ],
        ),
        compiler_params=pltpu.CompilerParams(
            dimension_semantics=("parallel", "arbitrary"),
            vmem_limit_bytes=_vmem_limit_bytes(),
        ),
    )(xp, wcat, b2)

    if pad_b or pad_d:
        out = out[:B, :D]
    return out


def gate_cross_layer_ref(x, w, wg, b, *, matmul_dtype=None):
    """Pure-JAX reference matching the PyTorch forward.

    matmul_dtype=jnp.bfloat16 emulates the kernel's bf16-matmul / f32-accumulate path.
    """
    x0 = x
    L = w.shape[0]
    for i in range(L):
        if matmul_dtype is None:
            xw = x @ w[i].T
            xs = x @ wg[i].T
        else:
            xm = x.astype(matmul_dtype)
            xw = jnp.dot(xm, w[i].T.astype(matmul_dtype), preferred_element_type=jnp.float32)
            xs = jnp.dot(xm, wg[i].T.astype(matmul_dtype), preferred_element_type=jnp.float32)
        xg = jax.nn.sigmoid(xs)
        x = x0 * (xw + b[i]) * xg + x
    return x


def _run_case(key, B, D, L):
    kx, kw, kwg, kb = jax.random.split(key, 4)
    x = jax.random.normal(kx, (B, D), dtype=jnp.float32)
    bound = 1.0 / (D ** 0.5)
    w = jax.random.uniform(kw, (L, D, D), minval=-bound, maxval=bound, dtype=jnp.float32)
    wg = jax.random.uniform(kwg, (L, D, D), minval=-bound, maxval=bound, dtype=jnp.float32)
    b = jax.random.uniform(kb, (L, D), minval=0.0, maxval=1.0, dtype=jnp.float32)

    wcat, b2 = prepare_gate_cross_params(w, wg, b)   # one-time prep
    out = jax.block_until_ready(gate_cross_layer(x, wcat, b2))
    assert out.shape == (B, D)

    # Check vs. a reference that uses the same bf16-matmul / f32-accumulate recipe
    # (kernel additionally uses an approximate-reciprocal sigmoid, hence 1e-2 tol).
    ref_bf16 = gate_cross_layer_ref(x, w, wg, b, matmul_dtype=jnp.bfloat16)
    assert jnp.allclose(out, ref_bf16, atol=1e-2, rtol=1e-2), "mismatch vs bf16-matmul reference"

    # Loose check vs. the exact f32 PyTorch-semantics reference.
    ref_f32 = gate_cross_layer_ref(x, w, wg, b)
    assert jnp.allclose(out, ref_f32, atol=1e-1, rtol=1e-1), "mismatch vs f32 reference"


if __name__ == "__main__":
    key = jax.random.PRNGKey(0)
    k1, k2 = jax.random.split(key)

    # Case 1: aligned shapes (B=16, D=128, 3 cross layers).
    _run_case(k1, B=16, D=128, L=3)
    # Case 2: ragged shapes (B=10, D=96, 2 cross layers) -> exercises batch/feature padding.
    _run_case(k2, B=10, D=96, L=2)

    print("KERNEL_OK")
</pallas_src>

<mosaic_0001>
module attributes {stable_mosaic.version = 11 : i64} {
  func.func @_gate_cross_kernel(%arg0: i32, %arg1: i32, %arg2: memref<16x128xf32, #tpu.memory_space<vmem>>, %arg3: memref<1x128x256xbf16, #tpu.memory_space<vmem>>, %arg4: memref<1x1x128xf32, #tpu.memory_space<vmem>>, %arg5: memref<16x128xf32, #tpu.memory_space<vmem>>, %arg6: memref<16x128xf32, #tpu.memory_space<vmem>>, %arg7: memref<16x128xf32, #tpu.memory_space<vmem>>) attributes {dimension_semantics = [#tpu.dimension_semantics<parallel>, #tpu.dimension_semantics<arbitrary>], iteration_bounds = array<i64: 1, 3>, scalar_prefetch = 0 : i64, scratch_operands = 2 : i64, tpu.core_type = #tpu.core_type<tc>, window_params = [{transform_indices = @transform_0, window_bounds = array<i64: 16, 128>}, {transform_indices = @transform_1, window_bounds = array<i64: 1, 128, 256>}, {transform_indices = @transform_2, window_bounds = array<i64: 1, 1, 128>}, {transform_indices = @transform_3, window_bounds = array<i64: 16, 128>}]} {
    %c0_i32 = arith.constant 0 : i32
    %0 = arith.cmpi eq, %arg1, %c0_i32 : i32
    %1 = arith.extui %0 : i1 to i32
    %c0_i32_0 = arith.constant 0 : i32
    %2 = arith.cmpi ne, %1, %c0_i32_0 : i32
    scf.if %2 {
      %c0_15 = arith.constant 0 : index
      %c0_16 = arith.constant 0 : index
      %28 = vector.load %arg2[%c0_15, %c0_16] : memref<16x128xf32, #tpu.memory_space<vmem>>, vector<16x128xf32>
      %c0_17 = arith.constant 0 : index
      %c0_18 = arith.constant 0 : index
      %29 = vector.load %arg6[%c0_17, %c0_18] : memref<16x128xf32, #tpu.memory_space<vmem>>, vector<16x128xf32>
      tpu.vector_store %arg6[%c0_17, %c0_18], %28 {strides = array<i32>} : memref<16x128xf32, #tpu.memory_space<vmem>>, vector<16x128xf32>,
      %c0_19 = arith.constant 0 : index
      %c0_20 = arith.constant 0 : index
      %30 = vector.load %arg7[%c0_19, %c0_20] : memref<16x128xf32, #tpu.memory_space<vmem>>, vector<16x128xf32>
      tpu.vector_store %arg7[%c0_19, %c0_20], %28 {strides = array<i32>} : memref<16x128xf32, #tpu.memory_space<vmem>>, vector<16x128xf32>,
    } else {
    }
    %c0 = arith.constant 0 : index
    %c0_1 = arith.constant 0 : index
    %3 = vector.load %arg6[%c0, %c0_1] : memref<16x128xf32, #tpu.memory_space<vmem>>, vector<16x128xf32>
    %c0_2 = arith.constant 0 : index
    %c0_3 = arith.constant 0 : index
    %4 = vector.load %arg7[%c0_2, %c0_3] : memref<16x128xf32, #tpu.memory_space<vmem>>, vector<16x128xf32>
    %5 = arith.truncf %4 : vector<16x128xf32> to vector<16x128xbf16>
    %c0_4 = arith.constant 0 : index
    %c0_5 = arith.constant 0 : index
    %c0_6 = arith.constant 0 : index
    %6 = vector.load %arg3[%c0_4, %c0_5, %c0_6] : memref<1x128x256xbf16, #tpu.memory_space<vmem>>, vector<1x128x256xbf16>
    %7 = vector.shape_cast %6 : vector<1x128x256xbf16> to vector<128x256xbf16>
    %cst = arith.constant dense<0.000000e+00> : vector<16x256xf32>
    %8 = tpu.matmul %5, %7, %cst {dimension_numbers = #tpu.dot_dimension_numbers<[1], [0], [0], [1], [0, 0, 1, 1], [], []>} : vector<16x128xbf16>, vector<128x256xbf16>, vector<16x256xf32> -> vector<16x256xf32>
    %9 = vector.extract_strided_slice %8 {offsets = [0, 0], sizes = [16, 128], strides = [1, 1]} : vector<16x256xf32> to vector<16x128xf32>
    %10 = vector.extract_strided_slice %8 {offsets = [0, 128], sizes = [16, 128], strides = [1, 1]} : vector<16x256xf32> to vector<16x128xf32>
    %cst_7 = arith.constant 0.000000e+00 : f32
    %11 = vector.broadcast %cst_7 : f32 to vector<16x128xf32>
    %12 = arith.subf %11, %10 : vector<16x128xf32>
    %13 = math.exp %12 : vector<16x128xf32>
    %cst_8 = arith.constant 1.000000e+00 : f32
    %14 = vector.broadcast %cst_8 : f32 to vector<16x128xf32>
    %15 = arith.addf %14, %13 : vector<16x128xf32>
    %16 = tpu.reciprocal %15 {approx = true} : vector<16x128xf32> -> vector<16x128xf32>
    %c0_9 = arith.constant 0 : index
    %c0_10 = arith.constant 0 : index
    %c0_11 = arith.constant 0 : index
    %17 = vector.load %arg4[%c0_9, %c0_10, %c0_11] : memref<1x1x128xf32, #tpu.memory_space<vmem>>, vector<1x1x128xf32>
    %18 = vector.shape_cast %17 : vector<1x1x128xf32> to vector<1x128xf32>
    %19 = vector.broadcast %18 : vector<1x128xf32> to vector<16x128xf32>
    %20 = arith.addf %9, %19 : vector<16x128xf32>
    %21 = arith.mulf %3, %20 : vector<16x128xf32>
    %22 = arith.mulf %21, %16 : vector<16x128xf32>
    %23 = arith.addf %22, %4 : vector<16x128xf32>
    %c0_12 = arith.constant 0 : index
    %c0_13 = arith.constant 0 : index
    %24 = vector.load %arg7[%c0_12, %c0_13] : memref<16x128xf32, #tpu.memory_space<vmem>>, vector<16x128xf32>
    tpu.vector_store %arg7[%c0_12, %c0_13], %23 {strides = array<i32>} : memref<16x128xf32, #tpu.memory_space<vmem>>, vector<16x128xf32>,
    %c2_i32 = arith.constant 2 : i32
    %25 = arith.cmpi eq, %arg1, %c2_i32 : i32
    %26 = arith.extui %25 : i1 to i32
    %c0_i32_14 = arith.constant 0 : i32
    %27 = arith.cmpi ne, %26, %c0_i32_14 : i32
    scf.if %27 {
      %c0_15 = arith.constant 0 : index
      %c0_16 = arith.constant 0 : index
      %28 = vector.load %arg5[%c0_15, %c0_16] : memref<16x128xf32, #tpu.memory_space<vmem>>, vector<16x128xf32>
      tpu.vector_store %arg5[%c0_15, %c0_16], %23 {strides = array<i32>} : memref<16x128xf32, #tpu.memory_space<vmem>>, vector<16x128xf32>,
    } else {
    }
    return
  }
  func.func @transform_0(%arg0: i32, %arg1: i32) -> (i32, i32) {
    %c0_i32 = arith.constant 0 : i32
    %c0_i32_0 = arith.constant 0 : i32
    return %arg0, %c0_i32 : i32, i32
  }
  func.func @transform_1(%arg0: i32, %arg1: i32) -> (i32, i32, i32) {
    %c0_i32 = arith.constant 0 : i32
    %c0_i32_0 = arith.constant 0 : i32
    %c0_i32_1 = arith.constant 0 : i32
    return %arg1, %c0_i32, %c0_i32_0 : i32, i32, i32
  }
  func.func @transform_2(%arg0: i32, %arg1: i32) -> (i32, i32, i32) {
    %c0_i32 = arith.constant 0 : i32
    %c0_i32_0 = arith.constant 0 : i32
    %c0_i32_1 = arith.constant 0 : i32
    return %arg1, %c0_i32, %c0_i32_0 : i32, i32, i32
  }
  func.func @transform_3(%arg0: i32, %arg1: i32) -> (i32, i32) {
    %c0_i32 = arith.constant 0 : i32
    %c0_i32_0 = arith.constant 0 : i32
    return %arg0, %c0_i32 : i32, i32
  }
}

</mosaic_0001>

<llo_original>
// kernel: tpu_custom_call.1
$region0: #{tpu_custom_call.1}
  #allocation0 [shape = 'u32[]', space=smem, size = 0x4, offset = 0x4, fixed_abs, tag = 'smem constant byte address 0x4 - core index']
  #allocation1 [shape = 'u32[144,128]{1,0:T(1,128)}', space=vmem, size = 0x12000, scoped, tag = 'internal scratch']
  #allocation2 [shape = 'f32[16,128]{1,0:T(8,128)}', space=vmem, size = 0x2000, scoped, tag = 'scratch operand']
  #allocation3 [shape = 'f32[16,128]{1,0:T(8,128)}', space=vmem, size = 0x2000, scoped, tag = 'scratch operand']
  %s0 = inlined_call_operand.hbm [shape: f32[16,128], index: 0, kind: input, shape index: {}]
  %s1 = inlined_call_operand.hbm [shape: bf16[3,128,256], index: 1, kind: input, shape index: {}]
  %s2 = inlined_call_operand.vmem [shape: f32[3,1,128], index: 2, kind: input, shape index: {}]
  %s3 = inlined_call_operand.hbm [shape: f32[16,128], index: 3, kind: output, shape index: {}]
  %s4 = sld [smem:[#allocation0]]
  $region61: #{tpu_custom_call.1} parent=0
    _
  %s6 = ssub.s32 1, %s4
  %s7 = scalar_select 0, %s6, %s4
  $region1: #{tpu_custom_call.1} parent=0
    #allocation4 [shape = 'u8[8192]{0}', space=vmem, size = 0x2000, scoped, tag = 'input window, operand 0, single buffered']
    #allocation5 [shape = 's32[2]{0}', space=sflag, size = 0x8, scoped, tag = 'scoped memory for tpu_custom_call.1']
    #allocation6 [shape = 's32[2]{0}', space=sflag, size = 0x8, scoped, tag = 'scoped memory for tpu_custom_call.1']
    #allocation7 [shape = 'u8[131072]{0}', space=vmem, size = 0x20000, scoped, tag = 'input window, operand 1']
    #allocation8 [shape = 's32[2]{0}', space=sflag, size = 0x8, scoped, tag = 'scoped memory for tpu_custom_call.1']
    #allocation9 [shape = 'u8[8192]{0}', space=vmem, size = 0x2000, scoped, tag = 'output window, operand 0, single buffered']
    %8 = vsyncpa [#allocation5], 0
    %9 = vsyncpa [#allocation8], 0
    %s10 = scalar_lea.sflag [#allocation8], 1
    %11 = vsyncpa %s10, 0
    %12 = vsyncpa [#allocation6], 0
    loop: start=0, step=1, limit=5
    $region2: #{tpu_custom_call.1} parent=1 // loop_pre_header
      _
    $region3: #{tpu_custom_call.1} parent=1 // loop_header
      %s14 = sphi 0, %s18
      %p15 = scmp.ge.s32.totalorder %s14, 5
      %s21 = sphi 0, %s33
      %s22 = sphi 0, %s29
      %s23 = sphi 0, %s21
      %s24 = sphi 0, %s22
      %s25 = sphi 0, %s23
      %s26 = sphi 0, %s24
      %s36 = sphi 0, %s38
      %s39 = sphi 0, %s36
      %s40 = sphi 0, %s39
      %s56 = sphi 0, %s40
      %s62 = sphi 0, %s64
      %s65 = sphi 0, %s62
      %s66 = sphi 0, %s65
      %s82 = sphi 0, %s66
      %s88 = sphi 0, %s90
      %s91 = sphi 0, %s88
      %s92 = sphi 0, %s91
      %s108 = sphi 0, %s92
      %s114 = sphi 0, %s116
      %s117 = sphi 0, %s114
      %s118 = sphi 0, %s117
      %s134 = sphi 0, %s118
    $region4: #{tpu_custom_call.1} parent=1 // loop_header_branch
      %17 = sbr.rel (%p15) target = $region8
    $region5: #{tpu_custom_call.1} parent=1 // loop_body
      %s19 = ssub.s32 %s14, 1
      %s20 = ssub.s32 %s14, 2
      %s27 = sadd.s32 1, %s22
      %p28 = scmp.ge.s32.totalorder %s27, 3
      %s29 = scalar_select %p28, 0, %s27
      %s30 = sadd.s32 1, %s21
      %s31 = scalar_select %p28, %s30, %s21
      %p32 = scmp.ge.s32.totalorder %s31, 1
      %s33 = scalar_select %p32, 0, %s31
      %s34 = ssub.s32 %s21, %s33
      %p35 = scmp.eq.s32.totalorder %s34, 0
      %s37 = sadd.s32 %s36, 1
      %s38 = scalar_select %p35, %s36, %s37
      %p41 = pneg %p35
      %p42 = scmp.eq.s32.totalorder %s14, 2
      %p43 = por %p41, %p42
      %p44 = scmp.ne.s32.totalorder %s36, %s39
      %p45 = scmp.eq.s32.totalorder %s14, 0
      %p46 = por %p44, %p45
      %p47 = scmp.ne.s32.totalorder %s36, %s39
      %p48 = scmp.eq.s32.totalorder %s19, 2
      %p49 = por %p47, %p48
      %p50 = scmp.ne.s32.totalorder %s39, %s40
      %p51 = scmp.eq.s32.totalorder %s19, 0
      %p52 = por %p50, %p51
      %p53 = scmp.ne.s32.totalorder %s39, %s40
      %p54 = scmp.eq.s32.totalorder %s20, 2
      %p55 = por %p53, %p54
      %p57 = scmp.ne.s32.totalorder %s40, %s56
      %p58 = scmp.eq.s32.totalorder %s20, 0
      %p59 = por %p57, %p58
      %s60 = ssub.s32 %s22, %s29
      %p61 = scmp.eq.s32.totalorder %s60, 0
      %s63 = sadd.s32 %s62, 1
      %s64 = scalar_select %p61, %s62, %s63
      %p67 = pneg %p61
      %p68 = scmp.eq.s32.totalorder %s14, 2
      %p69 = por %p67, %p68
      %p70 = scmp.ne.s32.totalorder %s62, %s65
      %p71 = scmp.eq.s32.totalorder %s14, 0
      %p72 = por %p70, %p71
      %p73 = scmp.ne.s32.totalorder %s62, %s65
      %p74 = scmp.eq.s32.totalorder %s19, 2
      %p75 = por %p73, %p74
      %p76 = scmp.ne.s32.totalorder %s65, %s66
      %p77 = scmp.eq.s32.totalorder %s19, 0
      %p78 = por %p76, %p77
      %p79 = scmp.ne.s32.totalorder %s65, %s66
      %p80 = scmp.eq.s32.totalorder %s20, 2
      %p81 = por %p79, %p80
      %p83 = scmp.ne.s32.totalorder %s66, %s82
      %p84 = scmp.eq.s32.totalorder %s20, 0
      %p85 = por %p83, %p84
      %s86 = ssub.s32 %s22, %s29
      %p87 = scmp.eq.s32.totalorder %s86, 0
      %s89 = sadd.s32 %s88, 1
      %s90 = scalar_select %p87, %s88, %s89
      %p93 = pneg %p87
      %p94 = scmp.eq.s32.totalorder %s14, 2
      %p95 = por %p93, %p94
      %p96 = scmp.ne.s32.totalorder %s88, %s91
      %p97 = scmp.eq.s32.totalorder %s14, 0
      %p98 = por %p96, %p97
      %p99 = scmp.ne.s32.totalorder %s88, %s91
      %p100 = scmp.eq.s32.totalorder %s19, 2
      %p101 = por %p99, %p100
      %p102 = scmp.ne.s32.totalorder %s91, %s92
      %p103 = scmp.eq.s32.totalorder %s19, 0
      %p104 = por %p102, %p103
      %p105 = scmp.ne.s32.totalorder %s91, %s92
      %p106 = scmp.eq.s32.totalorder %s20, 2
      %p107 = por %p105, %p106
      %p109 = scmp.ne.s32.totalorder %s92, %s108
      %p110 = scmp.eq.s32.totalorder %s20, 0
      %p111 = por %p109, %p110
      %s112 = ssub.s32 %s21, %s33
      %p113 = scmp.eq.s32.totalorder %s112, 0
      %s115 = sadd.s32 %s114, 1
      %s116 = scalar_select %p113, %s114, %s115
      %p119 = pneg %p113
      %p120 = scmp.eq.s32.totalorder %s14, 2
      %p121 = por %p119, %p120
      %p122 = scmp.ne.s32.totalorder %s114, %s117
      %p123 = scmp.eq.s32.totalorder %s14, 0
      %p124 = por %p122, %p123
      %p125 = scmp.ne.s32.totalorder %s114, %s117
      %p126 = scmp.eq.s32.totalorder %s19, 2
      %p127 = por %p125, %p126
      %p128 = scmp.ne.s32.totalorder %s117, %s118
      %p129 = scmp.eq.s32.totalorder %s19, 0
      %p130 = por %p128, %p129
      %p131 = scmp.ne.s32.totalorder %s117, %s118
      %p132 = scmp.eq.s32.totalorder %s20, 2
      %p133 = por %p131, %p132
      %p135 = scmp.ne.s32.totalorder %s118, %s134
      %p136 = scmp.eq.s32.totalorder %s20, 0
      %p137 = por %p135, %p136
      %p138 = scmp.le.s32.totalorder 1, %s14
      %p139 = scmp.lt.s32.totalorder %s14, 4
      %p140 = pnand %p138, %p139
      %p141 = pneg %p140
      // Predicated region
      $region9: #{tpu_custom_call.1} parent=5 // pred_check
        _
      $region10: #{tpu_custom_call.1} parent=5 // pred_check_branch
        %143 = sbr.rel (%p140) target = $region12
      $region11: #{tpu_custom_call.1} parent=5 // pred_region
        %s144 = ssub.s32 %s14, 1
        // Predicated region
        $region13: #{tpu_custom_call.1} parent=11 // pred_check
          %p145 = pneg %p52
        $region14: #{tpu_custom_call.1} parent=11 // pred_check_branch
          %147 = sbr.rel (%p145) target = $region16
        $region15: #{tpu_custom_call.1} parent=11 // pred_region
          %s148 = smul.u32 2, %s23
          %s150 = ssub.s32 256, 256
          %151 = vsyncadd [#allocation5], %s150
          %s152 = smul.addr %s148, 128
          %s153 = scalar_lea.hbm %s0, %s152
          %s154 = sshll.u32 [#allocation4], 4
          %s155 = int_to_ptr.vmem [resolvable:$true] %s154
          %160 = dma.hbm_to_vmem [thread:$0]  %s153, 256, %s155, [#allocation5], 128, 128, 8
        $region16: #{tpu_custom_call.1} parent=11 // pred_fallthru
          _
      $region12: #{tpu_custom_call.1} parent=5 // pred_fallthru
        _
      %p161 = scmp.lt.s32.totalorder %s14, 3
      // Predicated region
      $region17: #{tpu_custom_call.1} parent=5 // pred_check
        %p162 = pneg %p161
      $region18: #{tpu_custom_call.1} parent=5 // pred_check_branch
        %164 = sbr.rel (%p162) target = $region20
      $region19: #{tpu_custom_call.1} parent=5 // pred_region
        // Predicated region
        $region21: #{tpu_custom_call.1} parent=19 // pred_check
          %p165 = pneg %p72
        $region22: #{tpu_custom_call.1} parent=19 // pred_check_branch
          %167 = sbr.rel (%p165) target = $region24
        $region23: #{tpu_custom_call.1} parent=19 // pred_region
          %s168 = sand.u32 %s62, 1
          %s169 = scalar_lea.sflag [#allocation8], %s168
          %s170 = sand.u32 %s62, 1
          %s171 = smul.addr %s170, 128
          %s172 = scalar_lea.vmem [#allocation7], %s171
          %s174 = ssub.s32 2048, 2048
          %175 = vsyncadd %s169, %s174
          %s176 = smul.addr %s22, 32
          %s177 = smul.addr %s176, 64
          %s178 = scalar_lea.hbm %s1, %s177
          %s179 = sshll.u32 %s172, 4
          %s180 = int_to_ptr.vmem [resolvable:$true] %s179
          %185 = dma.hbm_to_vmem [thread:$0]  %s178, 2048, %s180, %s169, 128, 128, 8
        $region24: #{tpu_custom_call.1} parent=19 // pred_fallthru
          _
        // Predicated region
        $region25: #{tpu_custom_call.1} parent=19 // pred_check
          %p186 = pneg %p98
        $region26: #{tpu_custom_call.1} parent=19 // pred_check_branch
          %188 = sbr.rel (%p186) target = $region28
        $region27: #{tpu_custom_call.1} parent=19 // pred_region
          %p189 = scmp.lt.s32.totalorder %s22, 2
          %s190 = scalar_select %p189, %s22, 2
          %s191 = scalar_lea.vmem %s2, %s190
        $region28: #{tpu_custom_call.1} parent=19 // pred_fallthru
          _
      $region20: #{tpu_custom_call.1} parent=5 // pred_fallthru
        _
      %p192 = scmp.le.s32.totalorder 1, %s14
      %p193 = scmp.lt.s32.totalorder %s14, 4
      %p194 = pnand %p192, %p193
      %p195 = pneg %p194
      // Predicated region
      $region29: #{tpu_custom_call.1} parent=5 // pred_check
        _
      $region30: #{tpu_custom_call.1} parent=5 // pred_check_branch
        %197 = sbr.rel (%p194) target = $region32
      $region31: #{tpu_custom_call.1} parent=5 // pred_region
        %s198 = ssub.s32 %s14, 1
        // Predicated region
        $region33: #{tpu_custom_call.1} parent=31 // pred_check
          %p199 = pneg %p52
        $region34: #{tpu_custom_call.1} parent=31 // pred_check_branch
          %201 = sbr.rel (%p199) target = $region36
        $region35: #{tpu_custom_call.1} parent=31 // pred_region
          %202 = dma.done [#allocation5], 256
        $region36: #{tpu_custom_call.1} parent=31 // pred_fallthru
          _
        %s203 = sand.u32 %s65, 1
        %s204 = scalar_lea.sflag [#allocation8], %s203
        %s205 = sand.u32 %s65, 1
        %s206 = smul.addr %s205, 128
        %s207 = scalar_lea.vmem [#allocation7], %s206
        // Predicated region
        $region37: #{tpu_custom_call.1} parent=31 // pred_check
          %p208 = pneg %p78
        $region38: #{tpu_custom_call.1} parent=31 // pred_check_branch
          %210 = sbr.rel (%p208) target = $region40
        $region39: #{tpu_custom_call.1} parent=31 // pred_region
          %211 = dma.done %s204, 2048
        $region40: #{tpu_custom_call.1} parent=31 // pred_fallthru
          _
        %p212 = pneg %p52
        %p213 = pneg %p49
        %s214 = sand.u32 %s65, 1
        %s215 = scalar_lea.sflag [#allocation8], %s214
        %s216 = sand.u32 %s65, 1
        %s217 = smul.addr %s216, 128
        %s218 = scalar_lea.vmem [#allocation7], %s217
        %p219 = pneg %p78
        %p220 = pneg %p75
        %p221 = scmp.lt.s32.totalorder %s24, 2
        %s222 = scalar_select %p221, %s24, 2
        %s223 = scalar_lea.vmem %s2, %s222
        %p224 = pneg %p104
        %p225 = pneg %p101
        %p226 = pneg %p130
        %p227 = pneg %p127
        %s228 = smul.u32 2, %s23
        %p229 = scmp.lt.s32.totalorder %s24, 2
        %s230 = scalar_select %p229, %s24, 2
        %s231 = scalar_lea.vmem %s2, %s230
        %s232 = smul.u32 2, %s23
        %p234 = scmp.eq.s32.totalorder %s24, 0
        // Predicated region
        $region41: #{tpu_custom_call.1} parent=31 // pred_check
          %p235 = pneg %p234
        $region42: #{tpu_custom_call.1} parent=31 // pred_check_branch
          %237 = sbr.rel (%p235) target = $region44
        $region43: #{tpu_custom_call.1} parent=31 // pred_region
          %v238 = vld [vmem:[#allocation4] sm:$0xff]
          %v239 = vld [vmem:[#allocation4 + $0x8] sm:$0xff]
          %240 = vst [vmem:[#allocation2] sm:$0xff] %v238
          %241 = vst [vmem:[#allocation2 + $0x8] sm:$0xff] %v239
          %242 = vst [vmem:[#allocation3] sm:$0xff] %v238
          %243 = vst [vmem:[#allocation3 + $0x8] sm:$0xff] %v239
        $region44: #{tpu_custom_call.1} parent=31 // pred_fallthru
          _
        %v244 = vld [vmem:[#allocation2] sm:$0xff]
        %v245 = vld [vmem:[#allocation2 + $0x8] sm:$0xff]
        %v246 = vld [vmem:[#allocation3] sm:$0xff]
        %v247 = vld [vmem:[#allocation3 + $0x8] sm:$0xff]
        %v248 = vpack.c.bf16 %v247, %v246
        %v249 = vld [vmem:[%s207] sm:$0xff]
        %v250 = vld [vmem:[%s207 + $0x8] sm:$0xff]
        %v251 = vld [vmem:[%s207 + $0x10] sm:$0xff]
        %v252 = vld [vmem:[%s207 + $0x18] sm:$0xff]
        %v253 = vld [vmem:[%s207 + $0x20] sm:$0xff]
        %v254 = vld [vmem:[%s207 + $0x28] sm:$0xff]
        %v255 = vld [vmem:[%s207 + $0x30] sm:$0xff]
        %v256 = vld [vmem:[%s207 + $0x38] sm:$0xff]
        %v257 = vld [vmem:[%s207 + $0x40] sm:$0xff]
        %v258 = vld [vmem:[%s207 + $0x48] sm:$0xff]
        %v259 = vld [vmem:[%s207 + $0x50] sm:$0xff]
        %v260 = vld [vmem:[%s207 + $0x58] sm:$0xff]
        %v261 = vld [vmem:[%s207 + $0x60] sm:$0xff]
        %v262 = vld [vmem:[%s207 + $0x68] sm:$0xff]
        %v263 = vld [vmem:[%s207 + $0x70] sm:$0xff]
        %v264 = vld [vmem:[%s207 + $0x78] sm:$0xff]
        %v281 = vunpack.c.l.b16 %v249
        %v282 = vunpack.c.h.b16 %v249
        %v283 = vunpack.c.l.b16 %v250
        %v284 = vunpack.c.h.b16 %v250
        %v285 = vunpack.c.l.b16 %v251
        %v286 = vunpack.c.h.b16 %v251
        %v287 = vunpack.c.l.b16 %v252
        %v288 = vunpack.c.h.b16 %v252
        %v289 = vunpack.c.l.b16 %v253
        %v290 = vunpack.c.h.b16 %v253
        %v291 = vunpack.c.l.b16 %v254
        %v292 = vunpack.c.h.b16 %v254
        %v293 = vunpack.c.l.b16 %v255
        %v294 = vunpack.c.h.b16 %v255
        %v295 = vunpack.c.l.b16 %v256
        %v296 = vunpack.c.h.b16 %v256
        %v297 = vunpack.c.l.b16 %v257
        %v298 = vunpack.c.h.b16 %v257
        %v299 = vunpack.c.l.b16 %v258
        %v300 = vunpack.c.h.b16 %v258
        %v301 = vunpack.c.l.b16 %v259
        %v302 = vunpack.c.h.b16 %v259
        %v303 = vunpack.c.l.b16 %v260
        %v304 = vunpack.c.h.b16 %v260
        %v305 = vunpack.c.l.b16 %v261
        %v306 = vunpack.c.h.b16 %v261
        %v307 = vunpack.c.l.b16 %v262
        %v308 = vunpack.c.h.b16 %v262
        %v309 = vunpack.c.l.b16 %v263
        %v310 = vunpack.c.h.b16 %v263
        %v311 = vunpack.c.l.b16 %v264
        %v312 = vunpack.c.h.b16 %v264
        %v313 = vpack.c.b16 %v283, %v281
        %v314 = vpack.c.b16 %v284, %v282
        %v315 = vpack.c.b16 %v287, %v285
        %v316 = vpack.c.b16 %v288, %v286
        %v317 = vpack.c.b16 %v291, %v289
        %v318 = vpack.c.b16 %v292, %v290
        %v319 = vpack.c.b16 %v295, %v293
        %v320 = vpack.c.b16 %v296, %v294
        %v321 = vpack.c.b16 %v299, %v297
        %v322 = vpack.c.b16 %v300, %v298
        %v323 = vpack.c.b16 %v303, %v301
        %v324 = vpack.c.b16 %v304, %v302
        %v325 = vpack.c.b16 %v307, %v305
        %v326 = vpack.c.b16 %v308, %v306
        %v327 = vpack.c.b16 %v311, %v309
        %v328 = vpack.c.b16 %v312, %v310
        %345 = vmatprep.subr.bf16.mxu0 %v328
        %346 = vmatpush1.bf16.msra.mxu0 %v327
        %347 = vmatprep.subr.bf16.mxu0 %v326
        %348 = vmatpush1.bf16.msra.mxu0 %v325
        %349 = vmatprep.subr.bf16.mxu0 %v324
        %350 = vmatpush1.bf16.msra.mxu0 %v323
        %351 = vmatprep.subr.bf16.mxu0 %v322
        %352 = vmatpush1.bf16.msra.mxu0 %v321
        %353 = vmatprep.subr.bf16.mxu0 %v320
        %354 = vmatpush1.bf16.msra.mxu0 %v319
        %355 = vmatprep.subr.bf16.mxu0 %v318
        %356 = vmatpush1.bf16.msra.mxu0 %v317
        %357 = vmatprep.subr.bf16.mxu0 %v316
        %358 = vmatpush1.bf16.msra.mxu0 %v315
        %359 = vmatprep.subr.bf16.mxu0 %v314
        %360 = vmatpush1.bf16.msra.mxu0 %v313
        %361 = vmatprep.subr.bf16.mxu0 0
        %362 = vmatpush2.bf16.msra.mxu0 0
        %363 = vmatprep.subr.bf16.mxu0 0
        %364 = vmatpush2.bf16.msra.mxu0 0
        %365 = vmatprep.subr.bf16.mxu0 0
        %366 = vmatpush2.bf16.msra.mxu0 0
        %367 = vmatprep.subr.bf16.mxu0 0
        %368 = vmatpush2.bf16.msra.mxu0 0
        %369 = vmatprep.subr.bf16.mxu0 0
        %370 = vmatpush2.bf16.msra.mxu0 0
        %371 = vmatprep.subr.bf16.mxu0 0
        %372 = vmatpush2.bf16.msra.mxu0 0
        %373 = vmatprep.subr.bf16.mxu0 0
        %374 = vmatpush2.bf16.msra.mxu0 0
        %375 = vmatprep.subr.bf16.mxu0 0
        %376 = vmatpush2.bf16.msra.mxu0 0
        %377 = vmatprep.mubr.bf16.mxu0 0
        %378 = vmatmul.mubr.bf16.gmra.mxu0 %v248
        %v379 = vpop.f32.mrf.mxu0
        %v380 = vadd.f32 0.0, %v379
        %v381 = vpop.f32.mrf.mxu0
        %v382 = vadd.f32 0.0, %v381
        %v383 = vpop.f32.mrf.mxu0
        %v384 = vadd.f32 0.0, %v383
        %v385 = vpop.f32.mrf.mxu0
        %v386 = vadd.f32 0.0, %v385
        %387 = vdwg.mxu0
        %v388 = vsub.f32 0.0, %v382
        %v389 = vsub.f32 0.0, %v386
        %v390 = vmul.f32 %v388, 1.442695
        %v391 = vpow.pop %v390
        %v392 = vmul.f32 %v389, 1.442695
        %v393 = vpow.pop %v392
        %v394 = vadd.f32 %v391, 1.0
        %v395 = vadd.f32 %v393, 1.0
        %v396 = vrcp.pop %v394
        %v397 = vrcp.pop %v395
        %v398 = vld [vmem:[%s231] sm:$0x1]
        %v400 = vlaneseq
        %v401 = vshrl.u32 %v400, 7
        %v402 = vsub.s32 0, %v401
        %v403 = vrot.slane %v398, %v402
        %v405 = vadd.f32 %v380, %v403
        %v406 = vadd.f32 %v384, %v403
        %v407 = vmul.f32 %v244, %v405
        %v408 = vmul.f32 %v245, %v406
        %v409 = vmul.f32 %v407, %v396
        %v410 = vmul.f32 %v408, %v397
        %v411 = vadd.f32 %v409, %v246
        %v412 = vadd.f32 %v410, %v247
        %413 = vst [vmem:[#allocation3] sm:$0xff] %v411
        %414 = vst [vmem:[#allocation3 + $0x8] sm:$0xff] %v412
        %p415 = scmp.eq.s32.totalorder %s24, 2
        // Predicated region
        $region45: #{tpu_custom_call.1} parent=31 // pred_check
          %p416 = pneg %p415
        $region46: #{tpu_custom_call.1} parent=31 // pred_check_branch
          %418 = sbr.rel (%p416) target = $region48
        $region47: #{tpu_custom_call.1} parent=31 // pred_region
          %419 = vst [vmem:[#allocation9] sm:$0xff] %v411
          %420 = vst [vmem:[#allocation9 + $0x8] sm:$0xff] %v412
        $region48: #{tpu_custom_call.1} parent=31 // pred_fallthru
          _
        // Predicated region
        $region49: #{tpu_custom_call.1} parent=31 // pred_check
          %p421 = pneg %p127
        $region50: #{tpu_custom_call.1} parent=31 // pred_check_branch
          %423 = sbr.rel (%p421) target = $region52
        $region51: #{tpu_custom_call.1} parent=31 // pred_region
          %s424 = smul.u32 2, %s23
          %s426 = ssub.s32 256, 256
          %427 = vsyncadd [#allocation6], %s426
          %s428 = smul.addr %s424, 128
          %s429 = scalar_lea.hbm %s3, %s428
          %s430 = sshll.u32 [#allocation9], 4
          %s431 = int_to_ptr.vmem [resolvable:$true] %s430
          %436 = dma.vmem_to_hbm [thread:$0]  %s431, 256, %s429, [#allocation6], 128, 128, 8
        $region52: #{tpu_custom_call.1} parent=31 // pred_fallthru
          _
        // Predicated region
        $region53: #{tpu_custom_call.1} parent=31 // pred_check
          %p437 = pneg %p127
        $region54: #{tpu_custom_call.1} parent=31 // pred_check_branch
          %439 = sbr.rel (%p437) target = $region56
        $region55: #{tpu_custom_call.1} parent=31 // pred_region
          %440 = dma.done [#allocation6], 256
        $region56: #{tpu_custom_call.1} parent=31 // pred_fallthru
          _
      $region32: #{tpu_custom_call.1} parent=5 // pred_fallthru
        _
      %p441 = scmp.le.s32.totalorder 2, %s14
      // Predicated region
      $region57: #{tpu_custom_call.1} parent=5 // pred_check
        %p442 = pneg %p441
      $region58: #{tpu_custom_call.1} parent=5 // pred_check_branch
        %444 = sbr.rel (%p442) target = $region60
      $region59: #{tpu_custom_call.1} parent=5 // pred_region
        %s445 = ssub.s32 %s14, 2
      $region60: #{tpu_custom_call.1} parent=5 // pred_fallthru
        _
    $region6: #{tpu_custom_call.1} parent=1 // loop_footer
      %s18 = sadd.s32 1, %s14
    $region7: #{tpu_custom_call.1} parent=1 // loop_footer_branch
      %13 = sbr.rel target = $region3
    $region8: #{tpu_custom_call.1} parent=1 // loop_exit
      _
    %446 = vsyncpa [#allocation5], 1
    %s447 = scalar_lea.sflag [#allocation5], 1
    %448 = vsyncpa %s447, 1
    %449 = vsyncpa [#allocation8], 1
    %s450 = scalar_lea.sflag [#allocation8], 1
    %451 = vsyncpa %s450, 1
    %452 = vsyncpa [#allocation6], 1
    %s453 = scalar_lea.sflag [#allocation6], 1
    %454 = vsyncpa %s453, 1

</llo_original>
